<compile_context>
chip_gen: v5e
topology: v5e:2x2
jax: 0.10.0
libtpu: 0.0.40
codegen_flags: <defaults>
</compile_context>

<pallas_src>
import functools

import jax
import jax.numpy as jnp
from jax import lax
from jax.experimental import pallas as pl
from jax.experimental.pallas import tpu as pltpu

_NEG_BIG = -1e30  # segment-max identity; -inf would NaN through later matmuls


def _pool_reduce_kernel(bidx_row_ref, bidx_col_ref, x_ref, wpre_ref, bpre_ref,
                        sum_ref, cnt_ref, max_ref,
                        *, num_batches: int, pooling: str, tile_m: int,
                        n_rows: int, tiles_per_split: int):
    """Pass 1: prepool Linear + per-split segment sum / count / max."""
    i = pl.program_id(1)

    @pl.when(i == 0)
    def _init():
        sum_ref[...] = jnp.zeros_like(sum_ref)
        cnt_ref[...] = jnp.zeros_like(cnt_ref)
        max_ref[...] = jnp.full_like(max_ref, _NEG_BIG)

    # Unclamped global row offset of this tile.  The index_map clamps the
    # block index, so duplicated tiles (grid padding) and the partial tail
    # are handled purely by masking here.
    tile_idx = pl.program_id(0) * tiles_per_split + i
    row0 = tile_idx * tile_m
    valid_r = (row0 + lax.broadcasted_iota(jnp.int32, (1, tile_m), 1)) < n_rows
    valid_c = (row0 + lax.broadcasted_iota(jnp.int32, (tile_m, 1), 0)) < n_rows

    # Out-of-range rows: batch id -> num_batches (never matches), x -> 0
    # (keeps NaN garbage out of the one-hot matmul).
    bidx_r = jnp.where(valid_r, bidx_row_ref[...], num_batches)   # (1, tile_m)
    bidx_c = jnp.where(valid_c, bidx_col_ref[...], num_batches)   # (tile_m, 1)
    x = jnp.where(valid_c, x_ref[...], 0)                         # (tile_m, D)

    # ---- prepool Linear (MXU) ----
    h = jnp.dot(x.astype(jnp.float32), wpre_ref[...].astype(jnp.float32),
                preferred_element_type=jnp.float32)
    h = h + bpre_ref[...].astype(jnp.float32)                     # (tile_m, D)

    # One-hot (B, tile_m): counts are always accumulated (the max path needs
    # them in pass 2 to keep empty batches finite).
    seg = lax.broadcasted_iota(jnp.int32, (num_batches, tile_m), 0)
    onehot = (seg == bidx_r).astype(jnp.float32)                  # (B, tile_m)
    cnt_ref[...] += jnp.sum(onehot, axis=1, keepdims=True)        # (B, 1)

    if "mean" in pooling:
        sum_ref[...] += jnp.dot(onehot, h, preferred_element_type=jnp.float32)

    if "max" in pooling:
        # Per-batch loop keeps the working set at one (tile_m, D) temp, no
        # (B, tile_m, D) broadcast (which spilled the vreg file every step).
        # TODO(synk): chunk over batches for very large num_batches.
        rows = []
        for b in range(num_batches):
            hb = jnp.where(bidx_c == b, h, jnp.float32(_NEG_BIG))
            rows.append(jnp.max(hb, axis=0, keepdims=True))       # (1, D)
        tile_max = jnp.concatenate(rows, axis=0)                  # (B, D)
        max_ref[...] = jnp.maximum(max_ref[...], tile_max)


def _proj_gather_kernel(bidx_ref, sum_ref, cnt_ref, max_ref, wpm_ref, wpx_ref,
                        bproj_ref, out_ref, *, num_batches: int, pooling: str,
                        b_pad: int):
    """Pass 2: combine split partials + proj Linear + gather y[batch_index]."""
    d = max_ref.shape[-1]
    cnts = jnp.sum(cnt_ref[...], axis=0)                           # (B, 1)

    y = jnp.broadcast_to(bproj_ref[...].astype(jnp.float32), (num_batches, d))
    if "mean" in pooling:
        sums = jnp.sum(sum_ref[...], axis=0)                       # (B, D)
        mean = sums / jnp.maximum(cnts, 1.0)                       # exact divide
        y = y + jnp.dot(mean, wpm_ref[...].astype(jnp.float32),
                        preferred_element_type=jnp.float32)
    if "max" in pooling:
        maxs = jnp.max(max_ref[...], axis=0)                       # (B, D)
        maxs = jnp.where(cnts > 0, maxs, 0.0)                      # empty batch -> finite
        y = y + jnp.dot(maxs, wpx_ref[...].astype(jnp.float32),
                        preferred_element_type=jnp.float32)

    if b_pad > num_batches:
        y = jnp.concatenate(
            [y, jnp.zeros((b_pad - num_batches, d), jnp.float32)], axis=0)

    # Gather: lane-dense one-hot MXU matmul (K = b_pad >= 8).  Rows past n in
    # the partial tail compute garbage but are clipped by the output DMA.
    bidx = bidx_ref[...]                                           # (tile_m, 1)
    tile_m = bidx.shape[0]
    seg = lax.broadcasted_iota(jnp.int32, (tile_m, b_pad), 1)
    onehot = (seg == bidx).astype(jnp.float32)                     # (tile_m, b_pad)
    out = jnp.dot(onehot, y, preferred_element_type=jnp.float32)
    out_ref[...] = out.astype(out_ref.dtype)


def _round_up(v: int, m: int) -> int:
    return (v + m - 1) // m * m


def pool_forward(x, batch_index, w_pre, b_pre, w_proj, b_proj,
                 *, num_batches: int, pooling: str = "meanmax",
                 tile_m: int | None = None):
    n, d = x.shape
    if tile_m is None:
        tile_m = min(2048, _round_up(n, 128))   # sweepable 2048-8192 for big n
    assert tile_m % 128 == 0, "tile_m must be a multiple of 128 (lane width)"

    num_tiles = pl.cdiv(n, tile_m)
    split = 2 if num_tiles > 1 else 1           # 2 TensorCores on v7x
    tiles_per_split = pl.cdiv(num_tiles, split)

    bidx = batch_index.astype(jnp.int32)
    bidx_row = bidx.reshape(1, n)
    bidx_col = bidx.reshape(n, 1)
    b_pre2 = b_pre.reshape(1, d)
    b_proj2 = b_proj.reshape(1, d)

    if pooling == "meanmax":
        wpm, wpx = w_proj[:d], w_proj[d:]
    elif pooling == "mean":
        wpm, wpx = w_proj, jnp.zeros_like(w_proj)
    elif pooling == "max":
        wpm, wpx = jnp.zeros_like(w_proj), w_proj
    else:
        raise ValueError(f"unknown pooling {pooling!r}")

    def tile_col(c, i):   # clamped tile index -> (row-block, 0)
        return (jnp.minimum(c * tiles_per_split + i, num_tiles - 1), 0)

    def tile_row(c, i):   # clamped tile index -> (0, col-block)
        return (0, jnp.minimum(c * tiles_per_split + i, num_tiles - 1))

    # ---- Pass 1: per-split segment sum / count / max (accumulated in-place) ----
    kernel1 = functools.partial(
        _pool_reduce_kernel, num_batches=num_batches, pooling=pooling,
        tile_m=tile_m, n_rows=n, tiles_per_split=tiles_per_split)
    sums, cnts, maxs = pl.pallas_call(
        kernel1,
        out_shape=(
            jax.ShapeDtypeStruct((split, num_batches, d), jnp.float32),
            jax.ShapeDtypeStruct((split, num_batches, 1), jnp.float32),
            jax.ShapeDtypeStruct((split, num_batches, d), jnp.float32),
        ),
        grid_spec=pltpu.PrefetchScalarGridSpec(
            num_scalar_prefetch=0,
            grid=(split, tiles_per_split),
            in_specs=[
                pl.BlockSpec((1, tile_m), tile_row),           # batch ids (row)
                pl.BlockSpec((tile_m, 1), tile_col),           # batch ids (col)
                pl.BlockSpec((tile_m, d), tile_col),           # x tile
                pl.BlockSpec((d, d), lambda c, i: (0, 0)),     # W_pre (resident)
                pl.BlockSpec((1, d), lambda c, i: (0, 0)),     # b_pre
            ],
            out_specs=(
                pl.BlockSpec((None, num_batches, d), lambda c, i: (c, 0, 0)),
                pl.BlockSpec((None, num_batches, 1), lambda c, i: (c, 0, 0)),
                pl.BlockSpec((None, num_batches, d), lambda c, i: (c, 0, 0)),
            )),
        compiler_params=pltpu.CompilerParams(
            dimension_semantics=("parallel", "arbitrary"),
            vmem_limit_bytes=32 * 1024 * 1024),
    )(bidx_row, bidx_col, x, w_pre, b_pre2)

    # ---- Pass 2: combine + proj + gather back to rows ----
    b_pad = max(8, _round_up(num_batches, 8))
    kernel2 = functools.partial(_proj_gather_kernel, num_batches=num_batches,
                                pooling=pooling, b_pad=b_pad)
    out = pl.pallas_call(
        kernel2,
        out_shape=jax.ShapeDtypeStruct((n, d), x.dtype),
        grid_spec=pltpu.PrefetchScalarGridSpec(
            num_scalar_prefetch=0,
            grid=(num_tiles,),
            in_specs=[
                pl.BlockSpec((tile_m, 1), lambda i: (i, 0)),             # batch ids
                pl.BlockSpec((split, num_batches, d), lambda i: (0, 0, 0)),
                pl.BlockSpec((split, num_batches, 1), lambda i: (0, 0, 0)),
                pl.BlockSpec((split, num_batches, d), lambda i: (0, 0, 0)),
                pl.BlockSpec((d, d), lambda i: (0, 0)),                  # W_proj mean half
                pl.BlockSpec((d, d), lambda i: (0, 0)),                  # W_proj max half
                pl.BlockSpec((1, d), lambda i: (0, 0)),                  # b_proj
            ],
            out_specs=pl.BlockSpec((tile_m, d), lambda i: (i, 0))),
        compiler_params=pltpu.CompilerParams(
            dimension_semantics=("parallel",),                           # megacore on v7x
            vmem_limit_bytes=32 * 1024 * 1024),
    )(bidx_col, sums, cnts, maxs, wpm, wpx, b_proj2)

    return out


def _linear_init(key, fan_in, fan_out):
    """Deterministic nn.Linear-style init: U(-1/sqrt(fan_in), 1/sqrt(fan_in))."""
    kw, kb = jax.random.split(key)
    bound = 1.0 / (fan_in ** 0.5)
    w = jax.random.uniform(kw, (fan_in, fan_out), jnp.float32, -bound, bound)
    b = jax.random.uniform(kb, (fan_out,), jnp.float32, -bound, bound)
    return w, b


def _reference(x, batch_index, w_pre, b_pre, w_proj, b_proj, num_batches, pooling):
    h = x @ w_pre + b_pre
    seg = jax.nn.one_hot(batch_index, num_batches, dtype=jnp.float32)   # (N, B)
    parts = []
    if "mean" in pooling:
        counts = seg.sum(axis=0)[:, None]
        parts.append((seg.T @ h) / jnp.maximum(counts, 1.0))
    if "max" in pooling:
        masked = jnp.where(seg.T[:, :, None] > 0, h[None, :, :], _NEG_BIG)
        parts.append(masked.max(axis=1))
    pooled = jnp.concatenate(parts, axis=1) if pooling == "meanmax" else parts[0]
    y = pooled @ w_proj + b_proj
    return y[batch_index]


if __name__ == "__main__":
    d_model = 32
    pooling = "meanmax"

    key = jax.random.PRNGKey(0)
    kpre, kproj, kx1, kx2, kx3 = jax.random.split(key, 5)

    w_pre, b_pre = _linear_init(kpre, d_model, d_model)
    w_proj, b_proj = _linear_init(kproj, 2 * d_model, d_model)

    # Cases: (1) single partial tile; (2) exact 2 tiles -> 2-way split;
    # (3) 3 tiles with B=3 -> split + clamped duplicate tile + partial tail.
    cases = [
        ([5, 11], None, kx1),
        ([150, 106], 128, kx2),
        ([150, 106, 44], 128, kx3),
    ]
    for idx, (seq_lens, tile_m, kx) in enumerate(cases):
        n = sum(seq_lens)
        x = jax.random.normal(kx, (n, d_model), jnp.float32)
        bidx = jnp.concatenate(
            [jnp.full((l,), i, jnp.int32) for i, l in enumerate(seq_lens)])
        out = pool_forward(x, bidx, w_pre, b_pre, w_proj, b_proj,
                           num_batches=len(seq_lens), pooling=pooling,
                           tile_m=tile_m)
        out = jax.block_until_ready(out)
        ref = _reference(x, bidx, w_pre, b_pre, w_proj, b_proj,
                         len(seq_lens), pooling)
        assert out.shape == (n, d_model)
        assert jnp.allclose(out, ref, atol=2e-3, rtol=2e-3), f"case {idx} mismatch"

    print("KERNEL_OK")
</pallas_src>

<mosaic_0001>
module attributes {stable_mosaic.version = 11 : i64} {
  func.func @_pool_reduce_kernel(%arg0: i32, %arg1: i32, %arg2: memref<1x128xi32, #tpu.memory_space<vmem>>, %arg3: memref<128x1xi32, #tpu.memory_space<vmem>>, %arg4: memref<128x32xf32, #tpu.memory_space<vmem>>, %arg5: memref<32x32xf32, #tpu.memory_space<vmem>>, %arg6: memref<1x32xf32, #tpu.memory_space<vmem>>, %arg7: memref<1x2x32xf32, #tpu.memory_space<vmem>>, %arg8: memref<1x2x1xf32, #tpu.memory_space<vmem>>, %arg9: memref<1x2x32xf32, #tpu.memory_space<vmem>>) attributes {dimension_semantics = [#tpu.dimension_semantics<parallel>, #tpu.dimension_semantics<arbitrary>], iteration_bounds = array<i64: 1, 1>, scalar_prefetch = 0 : i64, scratch_operands = 0 : i64, tpu.core_type = #tpu.core_type<tc>, window_params = [{transform_indices = @transform_0, window_bounds = array<i64: 1, 128>}, {transform_indices = @transform_1, window_bounds = array<i64: 128, 1>}, {transform_indices = @transform_2, window_bounds = array<i64: 128, 32>}, {pipeline_mode = #tpu.pipeline_mode<synchronous>, transform_indices = @transform_3, window_bounds = array<i64: 32, 32>}, {pipeline_mode = #tpu.pipeline_mode<synchronous>, transform_indices = @transform_4, window_bounds = array<i64: 1, 32>}, {transform_indices = @transform_5, window_bounds = array<i64: 1, 2, 32>}, {transform_indices = @transform_6, window_bounds = array<i64: 1, 2, 1>}, {transform_indices = @transform_7, window_bounds = array<i64: 1, 2, 32>}]} {
    %c0_i32 = arith.constant 0 : i32
    %0 = arith.cmpi eq, %arg1, %c0_i32 : i32
    %1 = arith.extui %0 : i1 to i32
    %c0_i32_0 = arith.constant 0 : i32
    %2 = arith.cmpi ne, %1, %c0_i32_0 : i32
    scf.if %2 {
      %cst_39 = arith.constant 0.000000e+00 : f32
      %76 = vector.broadcast %cst_39 : f32 to vector<2x32xf32>
      %c0_40 = arith.constant 0 : index
      %c0_41 = arith.constant 0 : index
      %c0_42 = arith.constant 0 : index
      %77 = vector.load %arg7[%c0_40, %c0_41, %c0_42] : memref<1x2x32xf32, #tpu.memory_space<vmem>>, vector<1x2x32xf32>
      %78 = vector.shape_cast %77 : vector<1x2x32xf32> to vector<2x32xf32>
      %79 = vector.shape_cast %76 : vector<2x32xf32> to vector<1x2x32xf32>
      tpu.vector_store %arg7[%c0_40, %c0_41, %c0_42], %79 {strides = array<i32>} : memref<1x2x32xf32, #tpu.memory_space<vmem>>, vector<1x2x32xf32>,
      %cst_43 = arith.constant 0.000000e+00 : f32
      %80 = vector.broadcast %cst_43 : f32 to vector<2x1xf32>
      %c0_44 = arith.constant 0 : index
      %c0_45 = arith.constant 0 : index
      %c0_46 = arith.constant 0 : index
      %81 = vector.load %arg8[%c0_44, %c0_45, %c0_46] : memref<1x2x1xf32, #tpu.memory_space<vmem>>, vector<1x2x1xf32>
      %82 = vector.shape_cast %81 : vector<1x2x1xf32> to vector<2x1xf32>
      %83 = vector.shape_cast %80 : vector<2x1xf32> to vector<1x2x1xf32>
      tpu.vector_store %arg8[%c0_44, %c0_45, %c0_46], %83 {strides = array<i32>} : memref<1x2x1xf32, #tpu.memory_space<vmem>>, vector<1x2x1xf32>,
      %cst_47 = arith.constant -1.000000e+30 : f32
      %84 = vector.broadcast %cst_47 : f32 to vector<2x32xf32>
      %c0_48 = arith.constant 0 : index
      %c0_49 = arith.constant 0 : index
      %c0_50 = arith.constant 0 : index
      %85 = vector.load %arg9[%c0_48, %c0_49, %c0_50] : memref<1x2x32xf32, #tpu.memory_space<vmem>>, vector<1x2x32xf32>
      %86 = vector.shape_cast %85 : vector<1x2x32xf32> to vector<2x32xf32>
      %87 = vector.shape_cast %84 : vector<2x32xf32> to vector<1x2x32xf32>
      tpu.vector_store %arg9[%c0_48, %c0_49, %c0_50], %87 {strides = array<i32>} : memref<1x2x32xf32, #tpu.memory_space<vmem>>, vector<1x2x32xf32>,
    } else {
    }
    %c1_i32 = arith.constant 1 : i32
    %3 = arith.muli %arg0, %c1_i32 : i32
    %4 = arith.addi %3, %arg1 : i32
    %c128_i32 = arith.constant 128 : i32
    %5 = arith.muli %4, %c128_i32 : i32
    %6 = tpu.iota {dimensions = array<i32: 1>} : vector<1x128xi32>
    %7 = vector.broadcast %5 : i32 to vector<1x128xi32>
    %8 = arith.addi %7, %6 : vector<1x128xi32>
    %c16_i32 = arith.constant 16 : i32
    %9 = vector.broadcast %c16_i32 : i32 to vector<1x128xi32>
    %10 = arith.cmpi slt, %8, %9 : vector<1x128xi32>
    %11 = tpu.iota {dimensions = array<i32: 0>} : vector<128x1xi32>
    %12 = vector.broadcast %5 : i32 to vector<128x1xi32>
    %13 = arith.addi %12, %11 : vector<128x1xi32>
    %c16_i32_1 = arith.constant 16 : i32
    %14 = vector.broadcast %c16_i32_1 : i32 to vector<128x1xi32>
    %15 = arith.cmpi slt, %13, %14 : vector<128x1xi32>
    %c0 = arith.constant 0 : index
    %c0_2 = arith.constant 0 : index
    %16 = vector.load %arg2[%c0, %c0_2] : memref<1x128xi32, #tpu.memory_space<vmem>>, vector<1x128xi32>
    %c2_i32 = arith.constant 2 : i32
    %17 = vector.broadcast %c2_i32 : i32 to vector<1x128xi32>
    %18 = arith.select %10, %16, %17 : vector<1x128xi1>, vector<1x128xi32>
    %c0_3 = arith.constant 0 : index
    %c0_4 = arith.constant 0 : index
    %19 = vector.load %arg3[%c0_3, %c0_4] : memref<128x1xi32, #tpu.memory_space<vmem>>, vector<128x1xi32>
    %c2_i32_5 = arith.constant 2 : i32
    %20 = vector.broadcast %c2_i32_5 : i32 to vector<128x1xi32>
    %21 = arith.select %15, %19, %20 : vector<128x1xi1>, vector<128x1xi32>
    %c0_6 = arith.constant 0 : index
    %c0_7 = arith.constant 0 : index
    %22 = vector.load %arg4[%c0_6, %c0_7] : memref<128x32xf32, #tpu.memory_space<vmem>>, vector<128x32xf32>
    %c0_i32_8 = arith.constant 0 : i32
    %23 = arith.sitofp %c0_i32_8 : i32 to f32
    %24 = vector.shape_cast %15 : vector<128x1xi1> to vector<128x1xi1>
    %25 = vector.broadcast %24 : vector<128x1xi1> to vector<128x32xi1>
    %26 = vector.broadcast %23 : f32 to vector<128x32xf32>
    %27 = arith.select %25, %22, %26 : vector<128x32xi1>, vector<128x32xf32>
    %c0_9 = arith.constant 0 : index
    %c0_10 = arith.constant 0 : index
    %28 = vector.load %arg5[%c0_9, %c0_10] : memref<32x32xf32, #tpu.memory_space<vmem>>, vector<32x32xf32>
    %cst = arith.constant dense<0.000000e+00> : vector<128x32xf32>
    %29 = tpu.matmul %27, %28, %cst {dimension_numbers = #tpu.dot_dimension_numbers<[1], [0], [0], [1], [0, 0, 1, 1], [], []>} : vector<128x32xf32>, vector<32x32xf32>, vector<128x32xf32> -> vector<128x32xf32>
    %c0_11 = arith.constant 0 : index
    %c0_12 = arith.constant 0 : index
    %30 = vector.load %arg6[%c0_11, %c0_12] : memref<1x32xf32, #tpu.memory_space<vmem>>, vector<1x32xf32>
    %31 = vector.broadcast %30 : vector<1x32xf32> to vector<128x32xf32>
    %32 = arith.addf %29, %31 : vector<128x32xf32>
    %33 = tpu.iota {dimensions = array<i32: 0>} : vector<2x128xi32>
    %34 = vector.broadcast %18 : vector<1x128xi32> to vector<2x128xi32>
    %35 = arith.cmpi eq, %33, %34 : vector<2x128xi32>
    %36 = arith.extui %35 : vector<2x128xi1> to vector<2x128xi32>
    %37 = arith.sitofp %36 : vector<2x128xi32> to vector<2x128xf32>
    %c0_13 = arith.constant 0 : index
    %c0_14 = arith.constant 0 : index
    %c0_15 = arith.constant 0 : index
    %38 = vector.load %arg8[%c0_13, %c0_14, %c0_15] : memref<1x2x1xf32, #tpu.memory_space<vmem>>, vector<1x2x1xf32>
    %39 = vector.shape_cast %38 : vector<1x2x1xf32> to vector<2x1xf32>
    %cst_16 = arith.constant dense<0.000000e+00> : vector<2xf32>
    %40 = vector.multi_reduction <add>, %37, %cst_16 [1] : vector<2x128xf32> to vector<2xf32>
    %41 = vector.shape_cast %40 : vector<2xf32> to vector<2x1xf32>
    %42 = arith.addf %39, %41 : vector<2x1xf32>
    %c0_17 = arith.constant 0 : index
    %c0_18 = arith.constant 0 : index
    %c0_19 = arith.constant 0 : index
    %43 = vector.load %arg8[%c0_17, %c0_18, %c0_19] : memref<1x2x1xf32, #tpu.memory_space<vmem>>, vector<1x2x1xf32>
    %44 = vector.shape_cast %43 : vector<1x2x1xf32> to vector<2x1xf32>
    %45 = vector.shape_cast %42 : vector<2x1xf32> to vector<1x2x1xf32>
    tpu.vector_store %arg8[%c0_17, %c0_18, %c0_19], %45 {strides = array<i32>} : memref<1x2x1xf32, #tpu.memory_space<vmem>>, vector<1x2x1xf32>,
    %c0_20 = arith.constant 0 : index
    %c0_21 = arith.constant 0 : index
    %c0_22 = arith.constant 0 : index
    %46 = vector.load %arg7[%c0_20, %c0_21, %c0_22] : memref<1x2x32xf32, #tpu.memory_space<vmem>>, vector<1x2x32xf32>
    %47 = vector.shape_cast %46 : vector<1x2x32xf32> to vector<2x32xf32>
    %cst_23 = arith.constant dense<0.000000e+00> : vector<2x32xf32>
    %48 = tpu.matmul %37, %32, %cst_23 {dimension_numbers = #tpu.dot_dimension_numbers<[1], [0], [0], [1], [0, 0, 1, 1], [], []>} : vector<2x128xf32>, vector<128x32xf32>, vector<2x32xf32> -> vector<2x32xf32>
    %49 = arith.addf %47, %48 : vector<2x32xf32>
    %c0_24 = arith.constant 0 : index
    %c0_25 = arith.constant 0 : index
    %c0_26 = arith.constant 0 : index
    %50 = vector.load %arg7[%c0_24, %c0_25, %c0_26] : memref<1x2x32xf32, #tpu.memory_space<vmem>>, vector<1x2x32xf32>
    %51 = vector.shape_cast %50 : vector<1x2x32xf32> to vector<2x32xf32>
    %52 = vector.shape_cast %49 : vector<2x32xf32> to vector<1x2x32xf32>
    tpu.vector_store %arg7[%c0_24, %c0_25, %c0_26], %52 {strides = array<i32>} : memref<1x2x32xf32, #tpu.memory_space<vmem>>, vector<1x2x32xf32>,
    %c0_i32_27 = arith.constant 0 : i32
    %53 = vector.broadcast %c0_i32_27 : i32 to vector<128x1xi32>
    %54 = arith.cmpi eq, %21, %53 : vector<128x1xi32>
    %cst_28 = arith.constant -1.000000e+30 : f32
    %55 = vector.shape_cast %54 : vector<128x1xi1> to vector<128x1xi1>
    %56 = vector.broadcast %55 : vector<128x1xi1> to vector<128x32xi1>
    %57 = vector.broadcast %cst_28 : f32 to vector<128x32xf32>
    %58 = arith.select %56, %32, %57 : vector<128x32xi1>, vector<128x32xf32>
    %cst_29 = arith.constant dense<0xFF800000> : vector<32xf32>
    %59 = vector.multi_reduction <maximumf>, %58, %cst_29 [0] : vector<128x32xf32> to vector<32xf32>
    %60 = vector.shape_cast %59 : vector<32xf32> to vector<1x32xf32>
    %c1_i32_30 = arith.constant 1 : i32
    %61 = vector.broadcast %c1_i32_30 : i32 to vector<128x1xi32>
    %62 = arith.cmpi eq, %21, %61 : vector<128x1xi32>
    %cst_31 = arith.constant -1.000000e+30 : f32
    %63 = vector.shape_cast %62 : vector<128x1xi1> to vector<128x1xi1>
    %64 = vector.broadcast %63 : vector<128x1xi1> to vector<128x32xi1>
    %65 = vector.broadcast %cst_31 : f32 to vector<128x32xf32>
    %66 = arith.select %64, %32, %65 : vector<128x32xi1>, vector<128x32xf32>
    %cst_32 = arith.constant dense<0xFF800000> : vector<32xf32>
    %67 = vector.multi_reduction <maximumf>, %66, %cst_32 [0] : vector<128x32xf32> to vector<32xf32>
    %68 = vector.shape_cast %67 : vector<32xf32> to vector<1x32xf32>
    %69 = tpu.concatenate %60, %68 in 0 : vector<1x32xf32>, vector<1x32xf32> -> vector<2x32xf32>
    %c0_33 = arith.constant 0 : index
    %c0_34 = arith.constant 0 : index
    %c0_35 = arith.constant 0 : index
    %70 = vector.load %arg9[%c0_33, %c0_34, %c0_35] : memref<1x2x32xf32, #tpu.memory_space<vmem>>, vector<1x2x32xf32>
    %71 = vector.shape_cast %70 : vector<1x2x32xf32> to vector<2x32xf32>
    %72 = arith.maximumf %71, %69 : vector<2x32xf32>
    %c0_36 = arith.constant 0 : index
    %c0_37 = arith.constant 0 : index
    %c0_38 = arith.constant 0 : index
    %73 = vector.load %arg9[%c0_36, %c0_37, %c0_38] : memref<1x2x32xf32, #tpu.memory_space<vmem>>, vector<1x2x32xf32>
    %74 = vector.shape_cast %73 : vector<1x2x32xf32> to vector<2x32xf32>
    %75 = vector.shape_cast %72 : vector<2x32xf32> to vector<1x2x32xf32>
    tpu.vector_store %arg9[%c0_36, %c0_37, %c0_38], %75 {strides = array<i32>} : memref<1x2x32xf32, #tpu.memory_space<vmem>>, vector<1x2x32xf32>,
    return
  }
  func.func @transform_0(%arg0: i32, %arg1: i32) -> (i32, i32) {
    %c1_i32 = arith.constant 1 : i32
    %0 = arith.muli %arg0, %c1_i32 : i32
    %1 = arith.addi %0, %arg1 : i32
    %c0_i32 = arith.constant 0 : i32
    %2 = arith.minsi %1, %c0_i32 : i32
    %c0_i32_0 = arith.constant 0 : i32
    %c0_i32_1 = arith.constant 0 : i32
    return %c0_i32_0, %2 : i32, i32
  }
  func.func @transform_1(%arg0: i32, %arg1: i32) -> (i32, i32) {
    %c1_i32 = arith.constant 1 : i32
    %0 = arith.muli %arg0, %c1_i32 : i32
    %1 = arith.addi %0, %arg1 : i32
    %c0_i32 = arith.constant 0 : i32
    %2 = arith.minsi %1, %c0_i32 : i32
    %c0_i32_0 = arith.constant 0 : i32
    %c0_i32_1 = arith.constant 0 : i32
    return %2, %c0_i32_0 : i32, i32
  }
  func.func @transform_2(%arg0: i32, %arg1: i32) -> (i32, i32) {
    %c1_i32 = arith.constant 1 : i32
    %0 = arith.muli %arg0, %c1_i32 : i32
    %1 = arith.addi %0, %arg1 : i32
    %c0_i32 = arith.constant 0 : i32
    %2 = arith.minsi %1, %c0_i32 : i32
    %c0_i32_0 = arith.constant 0 : i32
    %c0_i32_1 = arith.constant 0 : i32
    return %2, %c0_i32_0 : i32, i32
  }
  func.func @transform_3(%arg0: i32, %arg1: i32) -> (i32, i32) {
    %c0_i32 = arith.constant 0 : i32
    %c0_i32_0 = arith.constant 0 : i32
    %c0_i32_1 = arith.constant 0 : i32
    return %c0_i32, %c0_i32_0 : i32, i32
  }
  func.func @transform_4(%arg0: i32, %arg1: i32) -> (i32, i32) {
    %c0_i32 = arith.constant 0 : i32
    %c0_i32_0 = arith.constant 0 : i32
    %c0_i32_1 = arith.constant 0 : i32
    return %c0_i32, %c0_i32_0 : i32, i32
  }
  func.func @transform_5(%arg0: i32, %arg1: i32) -> (i32, i32, i32) {
    %c0_i32 = arith.constant 0 : i32
    %c0_i32_0 = arith.constant 0 : i32
    %c0_i32_1 = arith.constant 0 : i32
    return %arg0, %c0_i32, %c0_i32_0 : i32, i32, i32
  }
  func.func @transform_6(%arg0: i32, %arg1: i32) -> (i32, i32, i32) {
    %c0_i32 = arith.constant 0 : i32
    %c0_i32_0 = arith.constant 0 : i32
    %c0_i32_1 = arith.constant 0 : i32
    return %arg0, %c0_i32, %c0_i32_0 : i32, i32, i32
  }
  func.func @transform_7(%arg0: i32, %arg1: i32) -> (i32, i32, i32) {
    %c0_i32 = arith.constant 0 : i32
    %c0_i32_0 = arith.constant 0 : i32
    %c0_i32_1 = arith.constant 0 : i32
    return %arg0, %c0_i32, %c0_i32_0 : i32, i32, i32
  }
}

</mosaic_0001>

<llo_original>
// kernel: tpu_custom_call.1
$region0: #{tpu_custom_call.1}
  #allocation0 [shape = 'u32[]', space=smem, size = 0x4, offset = 0x4, fixed_abs, tag = 'smem constant byte address 0x4 - core index']
  #allocation1 [shape = 'u32[72,128]{1,0:T(1,128)}', space=vmem, size = 0x9000, scoped, tag = 'internal scratch']
  %s0 = inlined_call_operand.vmem [shape: s32[1,16], index: 0, kind: input, shape index: {}]
  %s1 = inlined_call_operand.vmem [shape: s32[16,1], index: 1, kind: input, shape index: {}]
  %s2 = inlined_call_operand.vmem [shape: f32[16,32], index: 2, kind: input, shape index: {}]
  %s3 = inlined_call_operand.hbm [shape: f32[32,32], index: 3, kind: input, shape index: {}]
  %s4 = inlined_call_operand.vmem [shape: f32[1,32], index: 4, kind: input, shape index: {}]
  %s5 = inlined_call_operand.hbm [shape: f32[1,2,32], index: 5, kind: output, shape index: {0}]
  %s6 = inlined_call_operand.vmem [shape: f32[1,2,1], index: 6, kind: output, shape index: {1}]
  %s7 = inlined_call_operand.hbm [shape: f32[1,2,32], index: 7, kind: output, shape index: {2}]
  %8 = xla_tuple %s5, %s6, %s7
  %s9 = sld [smem:[#allocation0]]
  $region54: #{tpu_custom_call.1} parent=0
    _
  %s11 = ssub.s32 1, %s9
  %s12 = scalar_select 0, %s11, %s9
  $region1: #{tpu_custom_call.1} parent=0
    #allocation2 [shape = 'u8[16384]{0}', space=vmem, size = 0x4000, scoped, tag = 'input window, operand 3, single buffered']
    #allocation3 [shape = 's32[1]{0}', space=sflag, size = 0x4, scoped, tag = 'scoped memory for tpu_custom_call.1']
    #allocation4 [shape = 's32[1]{0}', space=sflag, size = 0x4, scoped, tag = 'scoped memory for tpu_custom_call.1']
    #allocation5 [shape = 'u8[1024]{0}', space=vmem, size = 0x400, scoped, tag = 'output window, operand 0, single buffered']
    #allocation6 [shape = 'u8[1024]{0}', space=vmem, size = 0x400, scoped, tag = 'output window, operand 2, single buffered']
    #allocation7 [shape = 's32[1]{0}', space=sflag, size = 0x4, scoped, tag = 'scoped memory for tpu_custom_call.1']
    %13 = vsyncpa [#allocation3], 0
    %14 = vsyncpa [#allocation4], 0
    %15 = vsyncpa [#allocation7], 0
    // Predicated region
    $region2: #{tpu_custom_call.1} parent=1 // pred_check
      _
    $region3: #{tpu_custom_call.1} parent=1 // pred_check_branch
      %17 = sbr.rel (0) target = $region5
    $region4: #{tpu_custom_call.1} parent=1 // pred_region
      %s18 = sadd.s32 0, 0
      %p19 = scmp.lt.s32.totalorder %s18, 0
      %s20 = scalar_select %p19, %s18, 0
      %p21 = scmp.lt.s32.totalorder %s20, 0
      %s22 = scalar_select %p21, %s20, 0
      %s23 = scalar_lea.vmem %s0, %s22
      %s24 = sadd.s32 0, 0
      %p25 = scmp.lt.s32.totalorder %s24, 0
      %s26 = scalar_select %p25, %s24, 0
    $region5: #{tpu_custom_call.1} parent=1 // pred_fallthru
      _
    // Predicated region
    $region6: #{tpu_custom_call.1} parent=1 // pred_check
      _
    $region7: #{tpu_custom_call.1} parent=1 // pred_check_branch
      %28 = sbr.rel (0) target = $region9
    $region8: #{tpu_custom_call.1} parent=1 // pred_region
      %s29 = sadd.s32 0, 0
      %p30 = scmp.lt.s32.totalorder %s29, 0
      %s31 = scalar_select %p30, %s29, 0
      %s32 = smul.u32 16, %s31
      %s33 = ssub.s32 2, %s32
      %s34 = smul.u32 8, %s33
      %p35 = scmp.lt.s32.totalorder %s32, 1
      %s36 = scalar_select %p35, %s32, 1
      %s37 = smul.addr %s36, 8
      %s38 = scalar_lea.vmem %s1, %s37
      %s39 = sadd.s32 0, 0
      %p40 = scmp.lt.s32.totalorder %s39, 0
      %s41 = scalar_select %p40, %s39, 0
      %s42 = smul.u32 16, %s41
      %s43 = ssub.s32 2, %s42
      %s44 = smul.u32 8, %s43
    $region9: #{tpu_custom_call.1} parent=1 // pred_fallthru
      _
    // Predicated region
    $region10: #{tpu_custom_call.1} parent=1 // pred_check
      _
    $region11: #{tpu_custom_call.1} parent=1 // pred_check_branch
      %46 = sbr.rel (0) target = $region13
    $region12: #{tpu_custom_call.1} parent=1 // pred_region
      %s47 = sadd.s32 0, 0
      %p48 = scmp.lt.s32.totalorder %s47, 0
      %s49 = scalar_select %p48, %s47, 0
      %s50 = smul.u32 16, %s49
      %s51 = ssub.s32 2, %s50
      %s52 = smul.u32 8, %s51
      %p53 = scmp.lt.s32.totalorder %s50, 1
      %s54 = scalar_select %p53, %s50, 1
      %s55 = smul.addr %s54, 8
      %s56 = scalar_lea.vmem %s2, %s55
      %s57 = sadd.s32 0, 0
      %p58 = scmp.lt.s32.totalorder %s57, 0
      %s59 = scalar_select %p58, %s57, 0
      %s60 = smul.u32 16, %s59
      %s61 = ssub.s32 2, %s60
      %s62 = smul.u32 8, %s61
    $region13: #{tpu_custom_call.1} parent=1 // pred_fallthru
      _
    // Predicated region
    $region14: #{tpu_custom_call.1} parent=1 // pred_check
      _
    $region15: #{tpu_custom_call.1} parent=1 // pred_check_branch
      %64 = sbr.rel (0) target = $region17
    $region16: #{tpu_custom_call.1} parent=1 // pred_region
      %66 = vsyncadd [#allocation3], 0
      %s67 = sshll.u32 %s3, 4
      %s68 = int_to_ptr.hbm [resolvable:$true] %s67
      %s69 = sshll.u32 [#allocation2], 4
      %s70 = int_to_ptr.vmem [resolvable:$true] %s69
      %75 = dma.hbm_to_vmem [thread:$0]  %s68, 512, %s70, [#allocation3], 128, 128, 8
    $region17: #{tpu_custom_call.1} parent=1 // pred_fallthru
      _
    // Predicated region
    $region18: #{tpu_custom_call.1} parent=1 // pred_check
      _
    $region19: #{tpu_custom_call.1} parent=1 // pred_check_branch
      %77 = sbr.rel (0) target = $region21
    $region20: #{tpu_custom_call.1} parent=1 // pred_region
      _
    $region21: #{tpu_custom_call.1} parent=1 // pred_fallthru
      _
    // Predicated region
    $region22: #{tpu_custom_call.1} parent=1 // pred_check
      _
    $region23: #{tpu_custom_call.1} parent=1 // pred_check_branch
      %79 = sbr.rel (0) target = $region25
    $region24: #{tpu_custom_call.1} parent=1 // pred_region
      %81 = dma.done [#allocation3], 512
    $region25: #{tpu_custom_call.1} parent=1 // pred_fallthru
      _
    %s82 = sadd.s32 0, 0
    %p83 = scmp.lt.s32.totalorder %s82, 0
    %s84 = scalar_select %p83, %s82, 0
    %p85 = scmp.lt.s32.totalorder %s84, 0
    %s86 = scalar_select %p85, %s84, 0
    %s87 = scalar_lea.vmem %s0, %s86
    %s88 = sadd.s32 0, 0
    %p89 = scmp.lt.s32.totalorder %s88, 0
    %s90 = scalar_select %p89, %s88, 0
    %s91 = smul.u32 16, %s90
    %s92 = ssub.s32 2, %s91
    %s93 = smul.u32 8, %s92
    %p94 = scmp.lt.s32.totalorder %s91, 1
    %s95 = scalar_select %p94, %s91, 1
    %s96 = smul.addr %s95, 8
    %s97 = scalar_lea.vmem %s1, %s96
    %s98 = sadd.s32 0, 0
    %p99 = scmp.lt.s32.totalorder %s98, 0
    %s100 = scalar_select %p99, %s98, 0
    %s101 = smul.u32 16, %s100
    %s102 = ssub.s32 2, %s101
    %s103 = smul.u32 8, %s102
    %p104 = scmp.lt.s32.totalorder %s101, 1
    %s105 = scalar_select %p104, %s101, 1
    %s106 = smul.addr %s105, 8
    %s107 = scalar_lea.vmem %s2, %s106
    %s108 = sadd.s32 0, 0
    %p109 = scmp.lt.s32.totalorder %s108, 0
    %s110 = scalar_select %p109, %s108, 0
    %p111 = scmp.lt.s32.totalorder %s110, 0
    %s112 = scalar_select %p111, %s110, 0
    %s113 = scalar_lea.vmem %s0, %s112
    %s114 = sadd.s32 0, 0
    %p115 = scmp.lt.s32.totalorder %s114, 0
    %s116 = scalar_select %p115, %s114, 0
    %s117 = sadd.s32 0, 0
    %p118 = scmp.lt.s32.totalorder %s117, 0
    %s119 = scalar_select %p118, %s117, 0
    %s120 = smul.u32 16, %s119
    %s121 = ssub.s32 2, %s120
    %s122 = smul.u32 8, %s121
    %p123 = scmp.lt.s32.totalorder %s120, 1
    %s124 = scalar_select %p123, %s120, 1
    %s125 = smul.addr %s124, 8
    %s126 = scalar_lea.vmem %s1, %s125
    %s127 = sadd.s32 0, 0
    %p128 = scmp.lt.s32.totalorder %s127, 0
    %s129 = scalar_select %p128, %s127, 0
    %s130 = smul.u32 16, %s129
    %s131 = ssub.s32 2, %s130
    %s132 = smul.u32 8, %s131
    %s133 = sadd.s32 0, 0
    %p134 = scmp.lt.s32.totalorder %s133, 0
    %s135 = scalar_select %p134, %s133, 0
    %s136 = smul.u32 16, %s135
    %s137 = ssub.s32 2, %s136
    %s138 = smul.u32 8, %s137
    %p139 = scmp.lt.s32.totalorder %s136, 1
    %s140 = scalar_select %p139, %s136, 1
    %s141 = smul.addr %s140, 8
    %s142 = scalar_lea.vmem %s2, %s141
    %s143 = sadd.s32 0, 0
    %p144 = scmp.lt.s32.totalorder %s143, 0
    %s145 = scalar_select %p144, %s143, 0
    %s146 = smul.u32 16, %s145
    %s147 = ssub.s32 2, %s146
    %s148 = smul.u32 8, %s147
    %p149 = scmp.eq.s32.totalorder 0, 0
    // Predicated region
    $region26: #{tpu_custom_call.1} parent=1 // pred_check
      %p150 = pneg %p149
    $region27: #{tpu_custom_call.1} parent=1 // pred_check_branch
      %152 = sbr.rel (%p150) target = $region29
    $region28: #{tpu_custom_call.1} parent=1 // pred_region
      %vm153 = vcmask 254976
      %154 = vst.msk [vmem:[#allocation5] sm:$0x3] %vm153, 0.0
      %vm155 = vcmask 1024
      %156 = vst.msk [vmem:[%s6] sm:$0x3] %vm155, 0.0
      %157 = vst.msk [vmem:[#allocation6] sm:$0x3] %vm153, -1e+30
    $region29: #{tpu_custom_call.1} parent=1 // pred_fallthru
      _
    %s158 = sadd.s32 0, 0
    %s159 = smul.u32 %s158, 128
    %v160 = vlaneseq
    %v161 = vand.u32 %v160, 127
    %v162 = vstv %s159
    %v163 = vadd.s32 %v162, %v161
    %vm164 = vcmp.lt.s32.totalorder %v163, 16
    %v165 = vlaneseq
    %v166 = vshrl.u32 %v165, 7
    %v167 = vadd.s32 %v166, 8
    %v168 = vadd.s32 %v166, 16
    %v169 = vadd.s32 %v166, 24
    %v170 = vadd.s32 %v166, 32
    %v171 = vadd.s32 %v166, 40
    %v172 = vadd.s32 %v166, 48
    %v173 = vadd.s32 %v166, 56
    %v174 = vadd.s32 %v166, 64
    %v175 = vadd.s32 %v166, 72
    %v176 = vadd.s32 %v166, 80
    %v177 = vadd.s32 %v166, 88
    %v178 = vadd.s32 %v166, 96
    %v179 = vadd.s32 %v166, 104
    %v180 = vadd.s32 %v166, 112
    %v181 = vadd.s32 %v166, 120
    %v182 = vadd.s32 %v162, %v166
    %v183 = vadd.s32 %v162, %v167
    %v184 = vadd.s32 %v162, %v168
    %v185 = vadd.s32 %v162, %v169
    %v186 = vadd.s32 %v162, %v170
    %v187 = vadd.s32 %v162, %v171
    %v188 = vadd.s32 %v162, %v172
    %v189 = vadd.s32 %v162, %v173
    %v190 = vadd.s32 %v162, %v174
    %v191 = vadd.s32 %v162, %v175
    %v192 = vadd.s32 %v162, %v176
    %v193 = vadd.s32 %v162, %v177
    %v194 = vadd.s32 %v162, %v178
    %v195 = vadd.s32 %v162, %v179
    %v196 = vadd.s32 %v162, %v180
    %v197 = vadd.s32 %v162, %v181
    %vm198 = vcmp.lt.s32.totalorder %v182, 16
    %vm199 = vcmp.lt.s32.totalorder %v183, 16
    %vm200 = vcmp.lt.s32.totalorder %v184, 16
    %vm201 = vcmp.lt.s32.totalorder %v185, 16
    %vm202 = vcmp.lt.s32.totalorder %v186, 16
    %vm203 = vcmp.lt.s32.totalorder %v187, 16
    %vm204 = vcmp.lt.s32.totalorder %v188, 16
    %vm205 = vcmp.lt.s32.totalorder %v189, 16
    %vm206 = vcmp.lt.s32.totalorder %v190, 16
    %vm207 = vcmp.lt.s32.totalorder %v191, 16
    %vm208 = vcmp.lt.s32.totalorder %v192, 16
    %vm209 = vcmp.lt.s32.totalorder %v193, 16
    %vm210 = vcmp.lt.s32.totalorder %v194, 16
    %vm211 = vcmp.lt.s32.totalorder %v195, 16
    %vm212 = vcmp.lt.s32.totalorder %v196, 16
    %vm213 = vcmp.lt.s32.totalorder %v197, 16
    %v214 = vld [vmem:[%s113] sm:$0x1]
    %v215 = vsel %vm164, %v214, 2
    %v216 = vld [vmem:[%s126] sm:$0xff]
    %v217 = vld [vmem:[%s126 + $0x8] sm:$0xff]
    %v218 = vld [vmem:[%s126 + $0x10] sm:$0xff]
    %v219 = vld [vmem:[%s126 + $0x18] sm:$0xff]
    %v220 = vld [vmem:[%s126 + $0x20] sm:$0xff]
    %v221 = vld [vmem:[%s126 + $0x28] sm:$0xff]
    %v222 = vld [vmem:[%s126 + $0x30] sm:$0xff]
    %v223 = vld [vmem:[%s126 + $0x38] sm:$0xff]
    %v224 = vld [vmem:[%s126 + $0x40] sm:$0xff]
    %v225 = vld [vmem:[%s126 + $0x48] sm:$0xff]
    %v226 = vld [vmem:[%s126 + $0x50] sm:$0xff]
    %v227 = vld [vmem:[%s126 + $0x58] sm:$0xff]
    %v228 = vld [vmem:[%s126 + $0x60] sm:$0xff]
    %v229 = vld [vmem:[%s126 + $0x68] sm:$0xff]
    %v230 = vld [vmem:[%s126 + $0x70] sm:$0xff]
    %v231 = vld [vmem:[%s126 + $0x78] sm:$0xff]
    %v232 = vsel %vm198, %v216, 2
    %v233 = vsel %vm199, %v217, 2
    %v234 = vsel %vm200, %v218, 2
    %v235 = vsel %vm201, %v219, 2
    %v236 = vsel %vm202, %v220, 2
    %v237 = vsel %vm203, %v221, 2
    %v238 = vsel %vm204, %v222, 2
    %v239 = vsel %vm205, %v223, 2
    %v240 = vsel %vm206, %v224, 2
    %v241 = vsel %vm207, %v225, 2
    %v242 = vsel %vm208, %v226, 2
    %v243 = vsel %vm209, %v227, 2
    %v244 = vsel %vm210, %v228, 2
    %v245 = vsel %vm211, %v229, 2
    %v246 = vsel %vm212, %v230, 2
    %v247 = vsel %vm213, %v231, 2
    %v248 = vld [vmem:[%s142] sm:$0xff]
    %v249 = vld [vmem:[%s142 + $0x8] sm:$0xff]
    %v250 = vld [vmem:[%s142 + $0x10] sm:$0xff]
    %v251 = vld [vmem:[%s142 + $0x18] sm:$0xff]
    %v252 = vld [vmem:[%s142 + $0x20] sm:$0xff]
    %v253 = vld [vmem:[%s142 + $0x28] sm:$0xff]
    %v254 = vld [vmem:[%s142 + $0x30] sm:$0xff]
    %v255 = vld [vmem:[%s142 + $0x38] sm:$0xff]
    %v256 = vld [vmem:[%s142 + $0x40] sm:$0xff]
    %v257 = vld [vmem:[%s142 + $0x48] sm:$0xff]
    %v258 = vld [vmem:[%s142 + $0x50] sm:$0xff]
    %v259 = vld [vmem:[%s142 + $0x58] sm:$0xff]
    %v260 = vld [vmem:[%s142 + $0x60] sm:$0xff]
    %v261 = vld [vmem:[%s142 + $0x68] sm:$0xff]
    %v262 = vld [vmem:[%s142 + $0x70] sm:$0xff]
    %v263 = vld [vmem:[%s142 + $0x78] sm:$0xff]
    %v264 = vsel %vm198, 1, 0
    %v265 = vsel %vm199, 1, 0
    %v266 = vsel %vm200, 1, 0
    %v267 = vsel %vm201, 1, 0
    %v268 = vsel %vm202, 1, 0
    %v269 = vsel %vm203, 1, 0
    %v270 = vsel %vm204, 1, 0
    %v271 = vsel %vm205, 1, 0
    %v272 = vsel %vm206, 1, 0
    %v273 = vsel %vm207, 1, 0
    %v274 = vsel %vm208, 1, 0
    %v275 = vsel %vm209, 1, 0
    %v276 = vsel %vm210, 1, 0
    %v277 = vsel %vm211, 1, 0
    %v278 = vsel %vm212, 1, 0
    %v279 = vsel %vm213, 1, 0
    %vm280 = vcmp.eq.s32.totalorder %v264, 1
    %vm281 = vcmp.eq.s32.totalorder %v265, 1
    %vm282 = vcmp.eq.s32.totalorder %v266, 1
    %vm283 = vcmp.eq.s32.totalorder %v267, 1
    %vm284 = vcmp.eq.s32.totalorder %v268, 1
    %vm285 = vcmp.eq.s32.totalorder %v269, 1
    %vm286 = vcmp.eq.s32.totalorder %v270, 1
    %vm287 = vcmp.eq.s32.totalorder %v271, 1
    %vm288 = vcmp.eq.s32.totalorder %v272, 1
    %vm289 = vcmp.eq.s32.totalorder %v273, 1
    %vm290 = vcmp.eq.s32.totalorder %v274, 1
    %vm291 = vcmp.eq.s32.totalorder %v275, 1
    %vm292 = vcmp.eq.s32.totalorder %v276, 1
    %vm293 = vcmp.eq.s32.totalorder %v277, 1
    %vm294 = vcmp.eq.s32.totalorder %v278, 1
    %vm295 = vcmp.eq.s32.totalorder %v279, 1
    %v296 = vsel %vm280, %v248, 0.0
    %v297 = vsel %vm281, %v249, 0.0
    %v298 = vsel %vm282, %v250, 0.0
    %v299 = vsel %vm283, %v251, 0.0
    %v300 = vsel %vm284, %v252, 0.0
    %v301 = vsel %vm285, %v253, 0.0
    %v302 = vsel %vm286, %v254, 0.0
    %v303 = vsel %vm287, %v255, 0.0
    %v304 = vsel %vm288, %v256, 0.0
    %v305 = vsel %vm289, %v257, 0.0
    %v306 = vsel %vm290, %v258, 0.0
    %v307 = vsel %vm291, %v259, 0.0
    %v308 = vsel %vm292, %v260, 0.0
    %v309 = vsel %vm293, %v261, 0.0
    %v310 = vsel %vm294, %v262, 0.0
    %v311 = vsel %vm295, %v263, 0.0
    %v312 = vld [vmem:[#allocation2] sm:$0xff]
    %v313 = vld [vmem:[#allocation2 + $0x8] sm:$0xff]
    %v314 = vld [vmem:[#allocation2 + $0x10] sm:$0xff]
    %v315 = vld [vmem:[#allocation2 + $0x18] sm:$0xff]
    %v316 = vld [vmem:[%s4] sm:$0x1]
    %v318 = vperm.slane %v316, 0
    %vm320 = vcmask 261120
    %v322 = vsel %vm320, %v296, 0
    %v325 = vsel %vm320, %v297, 0
    %v328 = vsel %vm320, %v298, 0
    %v331 = vsel %vm320, %v299, 0
    %v334 = vsel %vm320, %v300, 0
    %v337 = vsel %vm320, %v301, 0
    %v340 = vsel %vm320, %v302, 0
    %v343 = vsel %vm320, %v303, 0
    %v346 = vsel %vm320, %v304, 0
    %v349 = vsel %vm320, %v305, 0
    %v352 = vsel %vm320, %v306, 0
    %v355 = vsel %vm320, %v307, 0
    %v358 = vsel %vm320, %v308, 0
    %v361 = vsel %vm320, %v309, 0
    %v364 = vsel %vm320, %v310, 0
    %v367 = vsel %vm320, %v311, 0
    %369 = vmatpush.msra.mxu0 0.0
    %370 = vmatpush.msra.mxu0 0.0
    %371 = vmatpush.msra.mxu0 0.0
    %372 = vmatpush.msra.mxu0 0.0
    %373 = vmatpush.msra.mxu0 0.0
    %374 = vmatpush.msra.mxu0 0.0
    %375 = vmatpush.msra.mxu0 0.0
    %376 = vmatpush.msra.mxu0 0.0
    %377 = vmatpush.msra.mxu0 0.0
    %378 = vmatpush.msra.mxu0 0.0
    %379 = vmatpush.msra.mxu0 0.0
    %380 = vmatpush.msra.mxu0 0.0
    %381 = vmatpush.msra.mxu0 %v315
    %382 = vmatpush.msra.mxu0 %v314
    %383 = vmatpush.msra.mxu0 %v313
    %384 = vmatpush.msra.mxu0 %v312
    %385 = vmatmul.f32.gmra.mxu0 %v322
    %v386 = vpop.f32.mrf.mxu0
    %v387 = vadd.f32 %v318, %v386
    %388 = vmatmul.f32.gmra.mxu0 %v325
    %v389 = vpop.f32.mrf.mxu0
    %v390 = vadd.f32 %v318, %v389
    %391 = vmatmul.f32.gmra.mxu0 %v328
    %v392 = vpop.f32.mrf.mxu0
    %v393 = vadd.f32 %v318, %v392
    %394 = vmatmul.f32.gmra.mxu0 %v331
    %v395 = vpop.f32.mrf.mxu0
    %v396 = vadd.f32 %v318, %v395
    %397 = vmatmul.f32.gmra.mxu0 %v334
    %v398 = vpop.f32.mrf.mxu0
    %v399 = vadd.f32 %v318, %v398
    %400 = vmatmul.f32.gmra.mxu0 %v337
    %v401 = vpop.f32.mrf.mxu0
    %v402 = vadd.f32 %v318, %v401
    %403 = vmatmul.f32.gmra.mxu0 %v340
    %v404 = vpop.f32.mrf.mxu0
    %v405 = vadd.f32 %v318, %v404
    %406 = vmatmul.f32.gmra.mxu0 %v343
    %v407 = vpop.f32.mrf.mxu0
    %v408 = vadd.f32 %v318, %v407
    %409 = vmatmul.f32.gmra.mxu0 %v346
    %v410 = vpop.f32.mrf.mxu0
    %v411 = vadd.f32 %v318, %v410
    %412 = vmatmul.f32.gmra.mxu0 %v349
    %v413 = vpop.f32.mrf.mxu0
    %v414 = vadd.f32 %v318, %v413
    %415 = vmatmul.f32.gmra.mxu0 %v352
    %v416 = vpop.f32.mrf.mxu0
    %v417 = vadd.f32 %v318, %v416
    %418 = vmatmul.f32.gmra.mxu0 %v355
    %v419 = vpop.f32.mrf.mxu0
    %v420 = vadd.f32 %v318, %v419
    %421 = vmatmul.f32.gmra.mxu0 %v358
    %v422 = vpop.f32.mrf.mxu0
    %v423 = vadd.f32 %v318, %v422
    %424 = vmatmul.f32.gmra.mxu0 %v361
    %v425 = vpop.f32.mrf.mxu0
    %v426 = vadd.f32 %v318, %v425
    %427 = vmatmul.f32.gmra.mxu0 %v364
    %v428 = vpop.f32.mrf.mxu0
    %v429 = vadd.f32 %v318, %v428
    %430 = vmatmul.f32.gmra.mxu0 %v367
    %v431 = vpop.f32.mrf.mxu0
    %v432 = vadd.f32 %v318, %v431
    %433 = vdwg.mxu0
    %v434 = vperm.slane %v215, 0
    %vm435 = vcmp.eq.s32.totalorder %v166, %v434
    %v436 = vsel %vm435, 1, 0
    %v437 = vcvt.s32.f32 %v436
    %v438 = vld [vmem:[%s6] sm:$0x3]
    %vm439 = vcmask 1041408
    %v440 = vsel %vm439, %v437, 0.0
    %441 = vadd.xlane.f32.xlu0 %v440
    %v442 = vpop.xlane.xlu0 %441
    %v443 = vadd.f32 %v438, %v442
    %vm444 = vcmask 1024
    %445 = vst.msk [vmem:[%s6] sm:$0x3] %vm444, %v443
    %v446 = vld [vmem:[#allocation5] sm:$0x3]
    %447 = vmatpush.msra.mxu0 %v432
    %448 = vmatpush.msra.mxu0 %v429
    %449 = vmatpush.msra.mxu0 %v426
    %450 = vmatpush.msra.mxu0 %v423
    %451 = vmatpush.msra.mxu0 %v420
    %452 = vmatpush.msra.mxu0 %v417
    %453 = vmatpush.msra.mxu0 %v414
    %454 = vmatpush.msra.mxu0 %v411
    %455 = vmatpush.msra.mxu0 %v408
    %456 = vmatpush.msra.mxu0 %v405
    %457 = vmatpush.msra.mxu0 %v402
    %458 = vmatpush.msra.mxu0 %v399
    %459 = vmatpush.msra.mxu0 %v396
    %460 = vmatpush.msra.mxu0 %v393
    %461 = vmatpush.msra.mxu0 %v390
    %462 = vmatpush.msra.mxu0 %v387
    %463 = vmatmul.f32.gmra.mxu0 %v437
    %v464 = vpop.f32.mrf.mxu0
    %v465 = vadd.f32 0.0, %v464
    %466 = vdwg.mxu0
    %v467 = vadd.f32 %v446, %v465
    %vm468 = vcmask 254976
    %469 = vst.msk [vmem:[#allocation5] sm:$0x3] %vm468, %v467
    %vm470 = vcmp.eq.s32.totalorder %v232, 0
    %vm471 = vcmp.eq.s32.totalorder %v233, 0
    %vm472 = vcmp.eq.s32.totalorder %v234, 0
    %vm473 = vcmp.eq.s32.totalorder %v235, 0
    %vm474 = vcmp.eq.s32.totalorder %v236, 0
    %vm475 = vcmp.eq.s32.totalorder %v237, 0
    %vm476 = vcmp.eq.s32.totalorder %v238, 0
    %vm477 = vcmp.eq.s32.totalorder %v239, 0
    %vm478 = vcmp.eq.s32.totalorder %v240, 0
    %vm479 = vcmp.eq.s32.totalorder %v241, 0
    %vm480 = vcmp.eq.s32.totalorder %v242, 0
    %vm481 = vcmp.eq.s32.totalorder %v243, 0
    %vm482 = vcmp.eq.s32.totalorder %v244, 0
    %vm483 = vcmp.eq.s32.totalorder %v245, 0
    %vm484 = vcmp.eq.s32.totalorder %v246, 0
    %vm485 = vcmp.eq.s32.totalorder %v247, 0
    %v486 = vsel %vm470, 1, 0
    %v487 = vsel %vm471, 1, 0
    %v488 = vsel %vm472, 1, 0
    %v489 = vsel %vm473, 1, 0
    %v490 = vsel %vm474, 1, 0
    %v491 = vsel %vm475, 1, 0
    %v492 = vsel %vm476, 1, 0
    %v493 = vsel %vm477, 1, 0
    %v494 = vsel %vm478, 1, 0
    %v495 = vsel %vm479, 1, 0
    %v496 = vsel %vm480, 1, 0
    %v497 = vsel %vm481, 1, 0
    %v498 = vsel %vm482, 1, 0
    %v499 = vsel %vm483, 1, 0
    %v500 = vsel %vm484, 1, 0
    %v501 = vsel %vm485, 1, 0
    %502 = vset.pattern.permute.xlu0 0
    %503 = vperm.xlu0 %502, %v486
    %v504 = vpop.permute.xlu0 %503
    %505 = vset.pattern.permute.xlu0 0
    %506 = vperm.xlu0 %505, %v487
    %v507 = vpop.permute.xlu0 %506
    %508 = vset.pattern.permute.xlu0 0
    %509 = vperm.xlu0 %508, %v488
    %v510 = vpop.permute.xlu0 %509
    %511 = vset.pattern.permute.xlu0 0
    %512 = vperm.xlu0 %511, %v489
    %v513 = vpop.permute.xlu0 %512
    %514 = vset.pattern.permute.xlu0 0
    %515 = vperm.xlu0 %514, %v490
    %v516 = vpop.permute.xlu0 %515
    %517 = vset.pattern.permute.xlu0 0
    %518 = vperm.xlu0 %517, %v491
    %v519 = vpop.permute.xlu0 %518
    %520 = vset.pattern.permute.xlu0 0
    %521 = vperm.xlu0 %520, %v492
    %v522 = vpop.permute.xlu0 %521
    %523 = vset.pattern.permute.xlu0 0
    %524 = vperm.xlu0 %523, %v493
    %v525 = vpop.permute.xlu0 %524
    %526 = vset.pattern.permute.xlu0 0
    %527 = vperm.xlu0 %526, %v494
    %v528 = vpop.permute.xlu0 %527
    %529 = vset.pattern.permute.xlu0 0
    %530 = vperm.xlu0 %529, %v495
    %v531 = vpop.permute.xlu0 %530
    %532 = vset.pattern.permute.xlu0 0
    %533 = vperm.xlu0 %532, %v496
    %v534 = vpop.permute.xlu0 %533
    %535 = vset.pattern.permute.xlu0 0
    %536 = vperm.xlu0 %535, %v497
    %v537 = vpop.permute.xlu0 %536
    %538 = vset.pattern.permute.xlu0 0
    %539 = vperm.xlu0 %538, %v498
    %v540 = vpop.permute.xlu0 %539
    %541 = vset.pattern.permute.xlu0 0
    %542 = vperm.xlu0 %541, %v499
    %v543 = vpop.permute.xlu0 %542
    %544 = vset.pattern.permute.xlu0 0
    %545 = vperm.xlu0 %544, %v500
    %v546 = vpop.permute.xlu0 %545
    %547 = vset.pattern.permute.xlu0 0
    %548 = vperm.xlu0 %547, %v501
    %v549 = vpop.permute.xlu0 %548
    %vm550 = vcmp.eq.s32.totalorder %v504, 1
    %vm551 = vcmp.eq.s32.totalorder %v507, 1
    %vm552 = vcmp.eq.s32.totalorder %v510, 1
    %vm553 = vcmp.eq.s32.totalorder %v513, 1
    %vm554 = vcmp.eq.s32.totalorder %v516, 1
    %vm555 = vcmp.eq.s32.totalorder %v519, 1
    %vm556 = vcmp.eq.s32.totalorder %v522, 1
    %vm557 = vcmp.eq.s32.totalorder %v525, 1
    %vm558 = vcmp.eq.s32.totalorder %v528, 1
    %vm559 = vcmp.eq.s32.totalorder %v531, 1
    %vm560 = vcmp.eq.s32.totalorder %v534, 1
    %vm561 = vcmp.eq.s32.totalorder %v537, 1
    %vm562 = vcmp.eq.s32.totalorder %v540, 1
    %vm563 = vcmp.eq.s32.totalorder %v543, 1
    %vm564 = vcmp.eq.s32.totalorder %v546, 1
    %vm565 = vcmp.eq.s32.totalorder %v549, 1
    %v566 = vsel %vm550, %v387, -1e+30
    %v567 = vsel %vm551, %v390, -1e+30
    %v568 = vsel %vm552, %v393, -1e+30
    %v569 = vsel %vm553, %v396, -1e+30
    %v570 = vsel %vm554, %v399, -1e+30
    %v571 = vsel %vm555, %v402, -1e+30
    %v572 = vsel %vm556, %v405, -1e+30
    %v573 = vsel %vm557, %v408, -1e+30
    %v574 = vsel %vm558, %v411, -1e+30
    %v575 = vsel %vm559, %v414, -1e+30
    %v576 = vsel %vm560, %v417, -1e+30
    %v577 = vsel %vm561, %v420, -1e+30
    %v578 = vsel %vm562, %v423, -1e+30
    %v579 = vsel %vm563, %v426, -1e+30
    %v580 = vsel %vm564, %v429, -1e+30
    %v581 = vsel %vm565, %v432, -1e+30
    %v582 = vsel %vm320, %v566, -inf
    %v583 = vsel %vm320, %v567, -inf
    %v584 = vsel %vm320, %v568, -inf
    %v585 = vsel %vm320, %v569, -inf
    %v586 = vsel %vm320, %v570, -inf
    %v587 = vmax.f32 %v582, %v586
    %v588 = vsel %vm320, %v571, -inf
    %v589 = vmax.f32 %v583, %v588
    %v590 = vsel %vm320, %v572, -inf
    %v591 = vmax.f32 %v584, %v590
    %v592 = vsel %vm320, %v573, -inf
    %v593 = vmax.f32 %v585, %v592
    %v594 = vsel %vm320, %v574, -inf
    %v595 = vmax.f32 %v587, %v594
    %v596 = vsel %vm320, %v575, -inf
    %v597 = vmax.f32 %v589, %v596
    %v598 = vsel %vm320, %v576, -inf
    %v599 = vmax.f32 %v591, %v598
    %v600 = vsel %vm320, %v577, -inf
    %v601 = vmax.f32 %v593, %v600
    %v602 = vsel %vm320, %v578, -inf
    %v603 = vmax.f32 %v595, %v602
    %v604 = vsel %vm320, %v579, -inf
    %v605 = vmax.f32 %v597, %v604
    %v606 = vsel %vm320, %v580, -inf
    %v607 = vmax.f32 %v599, %v606
    %v608 = vsel %vm320, %v581, -inf
    %v609 = vmax.f32 %v601, %v608
    %v610 = vmax.f32 %v603, %v605
    %v611 = vmax.f32 %v607, %v609
    %v612 = vmax.f32 %v610, %v611
    %v613 = vrot.slane %v612, 4
    %v614 = vmax.f32 %v612, %v613
    %v615 = vrot.slane %v614, 2
    %v616 = vmax.f32 %v614, %v615
    %v617 = vrot.slane %v616, 1
    %v618 = vmax.f32 %v616, %v617
    %vm619 = vcmp.eq.s32.totalorder %v232, 1
    %vm620 = vcmp.eq.s32.totalorder %v233, 1
    %vm621 = vcmp.eq.s32.totalorder %v234, 1
    %vm622 = vcmp.eq.s32.totalorder %v235, 1
    %vm623 = vcmp.eq.s32.totalorder %v236, 1
    %vm624 = vcmp.eq.s32.totalorder %v237, 1
    %vm625 = vcmp.eq.s32.totalorder %v238, 1
    %vm626 = vcmp.eq.s32.totalorder %v239, 1
    %vm627 = vcmp.eq.s32.totalorder %v240, 1
    %vm628 = vcmp.eq.s32.totalorder %v241, 1
    %vm629 = vcmp.eq.s32.totalorder %v242, 1
    %vm630 = vcmp.eq.s32.totalorder %v243, 1
    %vm631 = vcmp.eq.s32.totalorder %v244, 1
    %vm632 = vcmp.eq.s32.totalorder %v245, 1
    %vm633 = vcmp.eq.s32.totalorder %v246, 1
    %vm634 = vcmp.eq.s32.totalorder %v247, 1
    %v635 = vsel %vm619, 1, 0
    %v636 = vsel %vm620, 1, 0
    %v637 = vsel %vm621, 1, 0
    %v638 = vsel %vm622, 1, 0
    %v639 = vsel %vm623, 1, 0
    %v640 = vsel %vm624, 1, 0
    %v641 = vsel %vm625, 1, 0
    %v642 = vsel %vm626, 1, 0
    %v643 = vsel %vm627, 1, 0
    %v644 = vsel %vm628, 1, 0
    %v645 = vsel %vm629, 1, 0
    %v646 = vsel %vm630, 1, 0
    %v647 = vsel %vm631, 1, 0
    %v648 = vsel %vm632, 1, 0
    %v649 = vsel %vm633, 1, 0
    %v650 = vsel %vm634, 1, 0
    %651 = vset.pattern.permute.xlu0 0
    %652 = vperm.xlu0 %651, %v635
    %v653 = vpop.permute.xlu0 %652
    %654 = vset.pattern.permute.xlu0 0
    %655 = vperm.xlu0 %654, %v636
    %v656 = vpop.permute.xlu0 %655
    %657 = vset.pattern.permute.xlu0 0
    %658 = vperm.xlu0 %657, %v637
    %v659 = vpop.permute.xlu0 %658
    %660 = vset.pattern.permute.xlu0 0
    %661 = vperm.xlu0 %660, %v638
    %v662 = vpop.permute.xlu0 %661
    %663 = vset.pattern.permute.xlu0 0
    %664 = vperm.xlu0 %663, %v639
    %v665 = vpop.permute.xlu0 %664
    %666 = vset.pattern.permute.xlu0 0
    %667 = vperm.xlu0 %666, %v640
    %v668 = vpop.permute.xlu0 %667
    %669 = vset.pattern.permute.xlu0 0
    %670 = vperm.xlu0 %669, %v641
    %v671 = vpop.permute.xlu0 %670
    %672 = vset.pattern.permute.xlu0 0
    %673 = vperm.xlu0 %672, %v642
    %v674 = vpop.permute.xlu0 %673
    %675 = vset.pattern.permute.xlu0 0
    %676 = vperm.xlu0 %675, %v643
    %v677 = vpop.permute.xlu0 %676
    %678 = vset.pattern.permute.xlu0 0
    %679 = vperm.xlu0 %678, %v644
    %v680 = vpop.permute.xlu0 %679
    %681 = vset.pattern.permute.xlu0 0
    %682 = vperm.xlu0 %681, %v645
    %v683 = vpop.permute.xlu0 %682
    %684 = vset.pattern.permute.xlu0 0
    %685 = vperm.xlu0 %684, %v646
    %v686 = vpop.permute.xlu0 %685
    %687 = vset.pattern.permute.xlu0 0
    %688 = vperm.xlu0 %687, %v647
    %v689 = vpop.permute.xlu0 %688
    %690 = vset.pattern.permute.xlu0 0
    %691 = vperm.xlu0 %690, %v648
    %v692 = vpop.permute.xlu0 %691
    %693 = vset.pattern.permute.xlu0 0
    %694 = vperm.xlu0 %693, %v649
    %v695 = vpop.permute.xlu0 %694
    %696 = vset.pattern.permute.xlu0 0
    %697 = vperm.xlu0 %696, %v650
    %v698 = vpop.permute.xlu0 %697
    %vm699 = vcmp.eq.s32.totalorder %v653, 1
    %vm700 = vcmp.eq.s32.totalorder %v656, 1
    %vm701 = vcmp.eq.s32.totalorder %v659, 1
    %vm702 = vcmp.eq.s32.totalorder %v662, 1
    %vm703 = vcmp.eq.s32.totalorder %v665, 1
    %vm704 = vcmp.eq.s32.totalorder %v668, 1
    %vm705 = vcmp.eq.s32.totalorder %v671, 1
    %vm706 = vcmp.eq.s32.totalorder %v674, 1
    %vm707 = vcmp.eq.s32.totalorder %v677, 1
    %vm708 = vcmp.eq.s32.totalorder %v680, 1
    %vm709 = vcmp.eq.s32.totalorder %v683, 1
    %vm710 = vcmp.eq.s32.totalorder %v686, 1
    %vm711 = vcmp.eq.s32.totalorder %v689, 1
    %vm712 = vcmp.eq.s32.totalorder %v692, 1
    %vm713 = vcmp.eq.s32.totalorder %v695, 1
    %vm714 = vcmp.eq.s32.totalorder %v698, 1
    %v715 = vsel %vm699, %v387, -1e+30
    %v716 = vsel %vm700, %v390, -1e+30
    %v717 = vsel %vm701, %v393, -1e+30
    %v718 = vsel %vm702, %v396, -1e+30
    %v719 = vsel %vm703, %v399, -1e+30
    %v720 = vsel %vm704, %v402, -1e+30
    %v721 = vsel %vm705, %v405, -1e+30
    %v722 = vsel %vm706, %v408, -1e+30
    %v723 = vsel %vm707, %v411, -1e+30
    %v724 = vsel %vm708, %v414, -1e+30
    %v725 = vsel %vm709, %v417, -1e+30
    %v726 = vsel %vm710, %v420, -1e+30
    %v727 = vsel %vm711, %v423, -1e+30
    %v728 = vsel %vm712, %v426, -1e+30
    %v729 = vsel %vm713, %v429, -1e+30
    %v730 = vsel %vm714, %v432, -1e+30
    %v731 = vsel %vm320, %v715, -inf
    %v732 = vsel %vm320, %v716, -inf
    %v733 = vsel %vm320, %v717, -inf
    %v734 = vsel %vm320, %v718, -inf
    %v735 = vsel %vm320, %v719, -inf
    %v736 = vmax.f32 %v731, %v735
    %v737 = vsel %vm320, %v720, -inf
    %v738 = vmax.f32 %v732, %v737
    %v739 = vsel %vm320, %v721, -inf
    %v740 = vmax.f32 %v733, %v739
    %v741 = vsel %vm320, %v722, -inf
    %v742 = vmax.f32 %v734, %v741
    %v743 = vsel %vm320, %v723, -inf
    %v744 = vmax.f32 %v736, %v743
    %v745 = vsel %vm320, %v724, -inf
    %v746 = vmax.f32 %v738, %v745
    %v747 = vsel %vm320, %v725, -inf
    %v748 = vmax.f32 %v740, %v747
    %v749 = vsel %vm320, %v726, -inf
    %v750 = vmax.f32 %v742, %v749
    %v751 = vsel %vm320, %v727, -inf
    %v752 = vmax.f32 %v744, %v751
    %v753 = vsel %vm320, %v728, -inf
    %v754 = vmax.f32 %v746, %v753
    %v755 = vsel %vm320, %v729, -inf
    %v756 = vmax.f32 %v748, %v755
    %v757 = vsel %vm320, %v730, -inf
    %v758 = vmax.f32 %v750, %v757
    %v759 = vmax.f32 %v752, %v754
    %v760 = vmax.f32 %v756, %v758
    %v761 = vmax.f32 %v759, %v760
    %v762 = vrot.slane %v761, 4
    %v763 = vmax.f32 %v761, %v762
    %v764 = vrot.slane %v763, 2
    %v765 = vmax.f32 %v763, %v764
    %v766 = vrot.slane %v765, 1
    %v767 = vmax.f32 %v765, %v766
    %vm768 = vcmask 1040384
    %v769 = vsel %vm768, %v618, %v767
    %v770 = vld [vmem:[#allocation6] sm:$0x3]
    %v771 = vmax.f32 %v770, %v769
    %772 = vst.msk [vmem:[#allocation6] sm:$0x3] %vm468, %v771
    // Predicated region
    $region30: #{tpu_custom_call.1} parent=1 // pred_check
      _
    $region31: #{tpu_custom_call.1} parent=1 // pred_check_branch
      %774 = sbr.rel (0) target = $region33
    $region32: #{tpu_custom_call.1} parent=1 // pred_region
      %776 = vsyncadd [#allocation4], 0
      %s778 = sshll.u32 [#allocation5], 4
      %s779 = int_to_ptr.vmem [resolvable:$true] %s778
      %s780 = sshll.u32 %s5, 4
      %s781 = int_to_ptr.hbm [resolvable:$true] %s780
      %783 = dma.vmem_to_hbm [thread:$0]  %s779, 32, %s781, [#allocation4]
    $region33: #{tpu_custom_call.1} parent=1 // pred_fallthru
      _
    // Predicated region
    $region34: #{tpu_custom_call.1} parent=1 // pred_check
      _
    $region35: #{tpu_custom_call.1} parent=1 // pred_check_branch
      %785 = sbr.rel (0) target = $region37
    $region36: #{tpu_custom_call.1} parent=1 // pred_region
      _
    $region37: #{tpu_custom_call.1} parent=1 // pred_fallthru
      _
    // Predicated region
    $region38: #{tpu_custom_call.1} parent=1 // pred_check
      _
    $region39: #{tpu_custom_call.1} parent=1 // pred_check_branch
      %787 = sbr.rel (0) target = $region41
    $region40: #{tpu_custom_call.1} parent=1 // pred_region
      %789 = vsyncadd [#allocation7], 0
      %s791 = sshll.u32 [#allocation6], 4
      %s792 = int_to_ptr.vmem [resolvable:$true] %s791
      %s793 = sshll.u32 %s7, 4
      %s794 = int_to_ptr.hbm [resolvable:$true] %s793
      %796 = dma.vmem_to_hbm [thread:$0]  %s792, 32, %s794, [#allocation7]
    $region41: #{tpu_custom_call.1} parent=1 // pred_fallthru
      _
    // Predicated region
    $region42: #{tpu_custom_call.1} parent=1 // pred_check
      _
    $region43: #{tpu_custom_call.1} parent=1 // pred_check_branch
      %798 = sbr.rel (0) target = $region45
    $region44: #{tpu_custom_call.1} parent=1 // pred_region
      %800 = dma.done [#allocation4], 32
    $region45: #{tpu_custom_call.1} parent=1 // pred_fallthru
      _
    // Predicated region
    $region46: #{tpu_custom_call.1} parent=1 // pred_check
      _
    $region47: #{tpu_custom_call.1} parent=1 // pred_check_branch
      %802 = sbr.rel (0) target = $region49
    $region48: #{tpu_custom_call.1} parent=1 // pred_region
      _
    $region49: #{tpu_custom_call.1} parent=1 // pred_fallthru
      _
    // Predicated region
    $region50: #{tpu_custom_call.1} parent=1 // pred_check
      _
    $region51: #{tpu_custom_call.1} parent=1 // pred_check_branch
      %804 = sbr.rel (0) target = $region53
    $region52: #{tpu_custom_call.1} parent=1 // pred_region
      %806 = dma.done [#allocation7], 32
    $region53: #{tpu_custom_call.1} parent=1 // pred_fallthru
      _
    %807 = vsyncpa [#allocation3], 1
    %808 = vsyncpa [#allocation4], 1
    %809 = vsyncpa [#allocation7], 1

</llo_original>
